<compile_context>
chip_gen: v6e
topology: v6e:2x2x1
jax: 0.10.0
libtpu: 0.0.40
codegen_flags: <defaults>
</compile_context>

<pallas_src>
import functools

import jax
import jax.numpy as jnp
from jax.experimental import pallas as pl
from jax.experimental.pallas import tpu as pltpu


def _attention_kernel(h_ref, w1_ref, b1_ref, w2_ref, o_ref, *, seq_valid):
    # h_ref : (BBLK*T_pad, 128) bf16   rows of BBLK sequences, (batch, time) flat
    # w1_ref: (128, 64) bf16          b1_ref: (1, 64) f32
    # w2_ref: (1, 64)  f32            (64->1 weights stored as a row)
    # o_ref : (BBLK, T_pad) f32       lane-dense attention weights (softmax over T)
    bblk, t_pad = o_ref.shape
    hid = w1_ref.shape[1]

    # Linear(128 -> 64): one MXU matmul with M = BBLK*T_pad rows, f32 accumulate.
    s = jnp.dot(h_ref[...], w1_ref[...],
                preferred_element_type=jnp.float32) + b1_ref[...]

    # Softmax(dim=-1) over the 64 hidden features (lane-axis reduce), f32 math.
    s = s - jnp.max(s, axis=-1, keepdims=True)
    e = jnp.exp(s)
    sm = e * pl.reciprocal(jnp.sum(e, axis=-1, keepdims=True), approx=True)

    # Tanh (EUP).
    t = jnp.tanh(sm)

    # Linear(64 -> 1): VPU multiply + lane reduce instead of an N=1 MXU pass.
    # T_pad % 8 == 0 (enforced by the wrapper) so this reshape is a free
    # sublane split; the reduce over H puts T on the lane axis.
    t3 = t.reshape(bblk, t_pad, hid)
    scores = jnp.sum(t3 * w2_ref[...], axis=-1)                 # (BBLK, T_pad)
    # NOTE: the 64->1 scalar bias b2 is a uniform shift of every score and is
    # exactly cancelled by the dim=1 softmax below, so it is dropped entirely.

    if seq_valid != t_pad:
        col = jax.lax.broadcasted_iota(jnp.int32, (bblk, t_pad), 1)
        scores = jnp.where(col < seq_valid, scores, -jnp.inf)

    # Softmax(dim=1) over the sequence axis (lane-axis reduce). Exact
    # reciprocal here so the returned attention weights sum to 1.
    scores = scores - jnp.max(scores, axis=-1, keepdims=True)
    e2 = jnp.exp(scores)
    o_ref[...] = e2 * pl.reciprocal(jnp.sum(e2, axis=-1, keepdims=True),
                                    approx=False)


def _choose_blocking(batch, t_pad, target_rows):
    """Pick (BBLK, B_pad): batch elements per grid step and padded batch.

    Constraints:
      * BBLK == B_pad or BBLK % 8 == 0 (sublane rule for the (BBLK, T_pad)
        output block; the input block rows BBLK*T_pad are then a multiple of 8).
      * BBLK*T_pad ~ target_rows so the double-buffered bf16 input block plus
        the f32 intermediates stay well inside scoped VMEM on all generations
        (including v7x's 64 MiB part) while amortizing the ~0.35us step cost.
      * Never fall back to one giant BBLK == B block for awkward B: pad B
        instead, which also keeps n_blocks >= 2 on large problems (v7x cores).
    """
    if batch * t_pad <= target_rows or batch <= 8:
        return batch, batch
    max_bblk = max((target_rows // t_pad) // 8 * 8, 8)
    divisors = [c for c in range(8, min(max_bblk, batch) + 1, 8)
                if batch % c == 0]
    best = max(divisors) if divisors else 0
    if best >= max_bblk // 2:
        return best, batch
    bblk = max_bblk
    b_pad = int(pl.cdiv(batch, bblk)) * bblk
    return bblk, b_pad


def attention_forward(h, w1, b1, w2, b2=None, *, target_rows=16384):
    """h: (B, T, 128) -> (B, T, 1). Matches torch Attention.forward.

    `b2` is accepted for API parity with the torch module but is unused: the
    final Softmax(dim=1) is exactly invariant to the scalar 64->1 bias.
    """
    del b2
    B, T, D = h.shape
    H = w1.shape[1]
    assert D == w1.shape[0]

    T_pad = ((T + 7) // 8) * 8
    BBLK, B_pad = _choose_blocking(B, T_pad, target_rows)
    n_blocks = B_pad // BBLK
    rows = BBLK * T_pad

    if (B_pad, T_pad) != (B, T):
        h = jnp.pad(h, ((0, B_pad - B), (0, T_pad - T), (0, 0)))

    # bf16 input stream for the 128->64 matmul: halves the dominant HBM
    # traffic into the kernel (in a real pipeline this cast fuses upstream).
    h2d = h.reshape(B_pad * T_pad, D).astype(jnp.bfloat16)
    w1_bf = w1.astype(jnp.bfloat16)
    b1_2d = b1.reshape(1, H).astype(jnp.float32)
    w2_row = w2.reshape(1, H).astype(jnp.float32)     # (H,1) -> row vector

    # Explicit scoped-VMEM budget: double-buffered input + output blocks,
    # a handful of (rows, 64) f32 intermediates, weights, plus slack.
    # Capped at 48 MiB so it is always v7x-safe (64 MiB physical VMEM).
    vmem_budget = (2 * rows * D * 2          # bf16 input block, double-buffered
                   + 2 * rows * 4            # f32 output block, double-buffered
                   + 6 * rows * H * 4        # f32 intermediates (s/e/sm/t/...)
                   + D * H * 2 + 4 * H * 4   # weights
                   + (1 << 20))              # slack
    vmem_limit = int(min(max(vmem_budget, 16 << 20), 48 << 20))

    kernel = functools.partial(_attention_kernel, seq_valid=T)

    out2d = pl.pallas_call(
        kernel,
        out_shape=jax.ShapeDtypeStruct((B_pad, T_pad), jnp.float32),
        grid_spec=pltpu.PrefetchScalarGridSpec(
            num_scalar_prefetch=0,
            grid=(n_blocks,),
            in_specs=[
                pl.BlockSpec((rows, D), lambda i: (i, 0)),
                pl.BlockSpec((D, H), lambda i: (0, 0)),
                pl.BlockSpec((1, H), lambda i: (0, 0)),
                pl.BlockSpec((1, H), lambda i: (0, 0)),
            ],
            out_specs=pl.BlockSpec((BBLK, T_pad), lambda i: (i, 0)),
        ),
        compiler_params=pltpu.CompilerParams(
            dimension_semantics=("parallel",),
            vmem_limit_bytes=vmem_limit,
        ),
    )(h2d, w1_bf, b1_2d, w2_row)

    return out2d[:B, :T].reshape(B, T, 1)


def _reference(h, w1, b1, w2, b2):
    s = jnp.einsum("btd,dh->bth", h, w1) + b1
    s = jax.nn.softmax(s, axis=-1)
    t = jnp.tanh(s)
    sc = jnp.einsum("bth,ho->bto", t, w2) + b2
    return jax.nn.softmax(sc, axis=1)


if __name__ == "__main__":
    B, T, D, H = 2, 8, 128, 64
    key = jax.random.PRNGKey(0)
    k_h, k_w1, k_b1, k_w2, k_b2 = jax.random.split(key, 5)

    h = jax.random.normal(k_h, (B, T, D), dtype=jnp.float32)
    # Deterministic parameter init (torch Linear-like uniform scale).
    w1 = jax.random.uniform(k_w1, (D, H), jnp.float32, -1.0 / jnp.sqrt(D), 1.0 / jnp.sqrt(D))
    b1 = jax.random.uniform(k_b1, (H,), jnp.float32, -1.0 / jnp.sqrt(D), 1.0 / jnp.sqrt(D))
    w2 = jax.random.uniform(k_w2, (H, 1), jnp.float32, -1.0 / jnp.sqrt(H), 1.0 / jnp.sqrt(H))
    b2 = jax.random.uniform(k_b2, (1,), jnp.float32, -1.0 / jnp.sqrt(H), 1.0 / jnp.sqrt(H))

    out = attention_forward(h, w1, b1, w2, b2)
    jax.block_until_ready(out)

    ref = _reference(h, w1, b1, w2, b2)
    assert out.shape == (B, T, 1)
    # bf16 input stream + approx reciprocal in the inner softmax introduce
    # ~1e-3-level relative error; tolerance chosen accordingly.
    assert jnp.allclose(out, ref, atol=5e-3, rtol=5e-3), "mismatch vs reference"
    # Final softmax uses the exact reciprocal: weights sum to 1 per sequence.
    assert jnp.allclose(jnp.sum(out, axis=1), 1.0, atol=1e-5)
    print("KERNEL_OK")
</pallas_src>

<mosaic_0001>
module attributes {stable_mosaic.version = 11 : i64} {
  func.func @_attention_kernel(%arg0: i32, %arg1: memref<16x128xbf16, #tpu.memory_space<vmem>>, %arg2: memref<128x64xbf16, #tpu.memory_space<vmem>>, %arg3: memref<1x64xf32, #tpu.memory_space<vmem>>, %arg4: memref<1x64xf32, #tpu.memory_space<vmem>>, %arg5: memref<2x8xf32, #tpu.memory_space<vmem>>) attributes {dimension_semantics = [#tpu.dimension_semantics<parallel>], iteration_bounds = array<i64: 1>, scalar_prefetch = 0 : i64, scratch_operands = 0 : i64, tpu.core_type = #tpu.core_type<tc>, window_params = [{transform_indices = @transform_0, window_bounds = array<i64: 16, 128>}, {pipeline_mode = #tpu.pipeline_mode<synchronous>, transform_indices = @transform_1, window_bounds = array<i64: 128, 64>}, {pipeline_mode = #tpu.pipeline_mode<synchronous>, transform_indices = @transform_2, window_bounds = array<i64: 1, 64>}, {pipeline_mode = #tpu.pipeline_mode<synchronous>, transform_indices = @transform_3, window_bounds = array<i64: 1, 64>}, {transform_indices = @transform_4, window_bounds = array<i64: 2, 8>}]} {
    %c0 = arith.constant 0 : index
    %c0_0 = arith.constant 0 : index
    %0 = vector.load %arg1[%c0, %c0_0] : memref<16x128xbf16, #tpu.memory_space<vmem>>, vector<16x128xbf16>
    %c0_1 = arith.constant 0 : index
    %c0_2 = arith.constant 0 : index
    %1 = vector.load %arg2[%c0_1, %c0_2] : memref<128x64xbf16, #tpu.memory_space<vmem>>, vector<128x64xbf16>
    %cst = arith.constant dense<0.000000e+00> : vector<16x64xf32>
    %2 = tpu.matmul %0, %1, %cst {dimension_numbers = #tpu.dot_dimension_numbers<[1], [0], [0], [1], [0, 0, 1, 1], [], []>} : vector<16x128xbf16>, vector<128x64xbf16>, vector<16x64xf32> -> vector<16x64xf32>
    %c0_3 = arith.constant 0 : index
    %c0_4 = arith.constant 0 : index
    %3 = vector.load %arg3[%c0_3, %c0_4] : memref<1x64xf32, #tpu.memory_space<vmem>>, vector<1x64xf32>
    %4 = vector.broadcast %3 : vector<1x64xf32> to vector<16x64xf32>
    %5 = arith.addf %2, %4 : vector<16x64xf32>
    %cst_5 = arith.constant dense<0xFF800000> : vector<16xf32>
    %6 = vector.multi_reduction <maximumf>, %5, %cst_5 [1] : vector<16x64xf32> to vector<16xf32>
    %7 = vector.shape_cast %6 : vector<16xf32> to vector<16x1xf32>
    %8 = vector.broadcast %7 : vector<16x1xf32> to vector<16x64xf32>
    %9 = arith.subf %5, %8 : vector<16x64xf32>
    %10 = math.exp %9 : vector<16x64xf32>
    %cst_6 = arith.constant dense<0.000000e+00> : vector<16xf32>
    %11 = vector.multi_reduction <add>, %10, %cst_6 [1] : vector<16x64xf32> to vector<16xf32>
    %12 = vector.shape_cast %11 : vector<16xf32> to vector<16x1xf32>
    %13 = tpu.reciprocal %12 {approx = true} : vector<16x1xf32> -> vector<16x1xf32>
    %14 = vector.broadcast %13 : vector<16x1xf32> to vector<16x64xf32>
    %15 = arith.mulf %10, %14 : vector<16x64xf32>
    %16 = math.tanh %15 : vector<16x64xf32>
    %17 = vector.shape_cast %16 : vector<16x64xf32> to vector<2x8x64xf32>
    %c0_7 = arith.constant 0 : index
    %c0_8 = arith.constant 0 : index
    %18 = vector.load %arg4[%c0_7, %c0_8] : memref<1x64xf32, #tpu.memory_space<vmem>>, vector<1x64xf32>
    %19 = vector.shape_cast %18 : vector<1x64xf32> to vector<1x1x64xf32>
    %20 = vector.broadcast %19 : vector<1x1x64xf32> to vector<2x8x64xf32>
    %21 = arith.mulf %17, %20 : vector<2x8x64xf32>
    %cst_9 = arith.constant dense<0.000000e+00> : vector<2x8xf32>
    %22 = vector.multi_reduction <add>, %21, %cst_9 [2] : vector<2x8x64xf32> to vector<2x8xf32>
    %cst_10 = arith.constant dense<0xFF800000> : vector<2xf32>
    %23 = vector.multi_reduction <maximumf>, %22, %cst_10 [1] : vector<2x8xf32> to vector<2xf32>
    %24 = vector.shape_cast %23 : vector<2xf32> to vector<2x1xf32>
    %25 = vector.broadcast %24 : vector<2x1xf32> to vector<2x8xf32>
    %26 = arith.subf %22, %25 : vector<2x8xf32>
    %27 = math.exp %26 : vector<2x8xf32>
    %cst_11 = arith.constant dense<0.000000e+00> : vector<2xf32>
    %28 = vector.multi_reduction <add>, %27, %cst_11 [1] : vector<2x8xf32> to vector<2xf32>
    %29 = vector.shape_cast %28 : vector<2xf32> to vector<2x1xf32>
    %30 = tpu.reciprocal %29 : vector<2x1xf32> -> vector<2x1xf32>
    %31 = vector.broadcast %30 : vector<2x1xf32> to vector<2x8xf32>
    %32 = arith.mulf %27, %31 : vector<2x8xf32>
    %c0_12 = arith.constant 0 : index
    %c0_13 = arith.constant 0 : index
    %33 = vector.load %arg5[%c0_12, %c0_13] : memref<2x8xf32, #tpu.memory_space<vmem>>, vector<2x8xf32>
    tpu.vector_store %arg5[%c0_12, %c0_13], %32 {strides = array<i32>} : memref<2x8xf32, #tpu.memory_space<vmem>>, vector<2x8xf32>,
    return
  }
  func.func @transform_0(%arg0: i32) -> (i32, i32) {
    %c0_i32 = arith.constant 0 : i32
    %c0_i32_0 = arith.constant 0 : i32
    return %arg0, %c0_i32 : i32, i32
  }
  func.func @transform_1(%arg0: i32) -> (i32, i32) {
    %c0_i32 = arith.constant 0 : i32
    %c0_i32_0 = arith.constant 0 : i32
    %c0_i32_1 = arith.constant 0 : i32
    return %c0_i32, %c0_i32_0 : i32, i32
  }
  func.func @transform_2(%arg0: i32) -> (i32, i32) {
    %c0_i32 = arith.constant 0 : i32
    %c0_i32_0 = arith.constant 0 : i32
    %c0_i32_1 = arith.constant 0 : i32
    return %c0_i32, %c0_i32_0 : i32, i32
  }
  func.func @transform_3(%arg0: i32) -> (i32, i32) {
    %c0_i32 = arith.constant 0 : i32
    %c0_i32_0 = arith.constant 0 : i32
    %c0_i32_1 = arith.constant 0 : i32
    return %c0_i32, %c0_i32_0 : i32, i32
  }
  func.func @transform_4(%arg0: i32) -> (i32, i32) {
    %c0_i32 = arith.constant 0 : i32
    %c0_i32_0 = arith.constant 0 : i32
    return %arg0, %c0_i32 : i32, i32
  }
}

</mosaic_0001>

<llo_original>
// kernel: tpu_custom_call.1
$region0: #{tpu_custom_call.1}
  #allocation0 [shape = 'u32[]', space=smem, size = 0x4, offset = 0x4, fixed_abs, tag = 'smem constant byte address 0x4 - core index']
  #allocation1 [shape = 'u32[144,128]{1,0:T(1,128)}', space=vmem, size = 0x12000, scoped, tag = 'internal scratch']
  %s0 = inlined_call_operand.vmem [shape: bf16[16,128], index: 0, kind: input, shape index: {}]
  %s1 = inlined_call_operand.vmem [shape: bf16[128,64], index: 1, kind: input, shape index: {}]
  %s2 = inlined_call_operand.vmem [shape: f32[1,64], index: 2, kind: input, shape index: {}]
  %s3 = inlined_call_operand.vmem [shape: f32[1,64], index: 3, kind: input, shape index: {}]
  %s4 = inlined_call_operand.hbm [shape: f32[2,8], index: 4, kind: output, shape index: {}]
  %s5 = sld [smem:[#allocation0]]
  $region26: #{tpu_custom_call.1} parent=0
    _
  %s7 = ssub.s32 1, %s5
  %s8 = scalar_select 0, %s7, %s5
  $region1: #{tpu_custom_call.1} parent=0
    #allocation2 [shape = 'u8[1024]{0}', space=vmem, size = 0x400, scoped, tag = 'output window, operand 0, single buffered']
    #allocation3 [shape = 's32[1]{0}', space=sflag, size = 0x4, scoped, tag = 'scoped memory for tpu_custom_call.1']
    %9 = vsyncpa [#allocation3], 0
    // Predicated region
    $region2: #{tpu_custom_call.1} parent=1 // pred_check
      _
    $region3: #{tpu_custom_call.1} parent=1 // pred_check_branch
      %11 = sbr.rel (0) target = $region5
    $region4: #{tpu_custom_call.1} parent=1 // pred_region
      _
    $region5: #{tpu_custom_call.1} parent=1 // pred_fallthru
      _
    // Predicated region
    $region6: #{tpu_custom_call.1} parent=1 // pred_check
      _
    $region7: #{tpu_custom_call.1} parent=1 // pred_check_branch
      %13 = sbr.rel (0) target = $region9
    $region8: #{tpu_custom_call.1} parent=1 // pred_region
      _
    $region9: #{tpu_custom_call.1} parent=1 // pred_fallthru
      _
    // Predicated region
    $region10: #{tpu_custom_call.1} parent=1 // pred_check
      _
    $region11: #{tpu_custom_call.1} parent=1 // pred_check_branch
      %15 = sbr.rel (0) target = $region13
    $region12: #{tpu_custom_call.1} parent=1 // pred_region
      _
    $region13: #{tpu_custom_call.1} parent=1 // pred_fallthru
      _
    // Predicated region
    $region14: #{tpu_custom_call.1} parent=1 // pred_check
      _
    $region15: #{tpu_custom_call.1} parent=1 // pred_check_branch
      %17 = sbr.rel (0) target = $region17
    $region16: #{tpu_custom_call.1} parent=1 // pred_region
      _
    $region17: #{tpu_custom_call.1} parent=1 // pred_fallthru
      _
    %v19 = vld [vmem:[%s0] sm:$0xf]
    %v20 = vld [vmem:[%s0 + $0x4] sm:$0xf]
    %v21 = vld [vmem:[%s1] sm:$0xf]
    %v22 = vld [vmem:[%s1 + $0x4] sm:$0xf]
    %v23 = vld [vmem:[%s1 + $0x8] sm:$0xf]
    %v24 = vld [vmem:[%s1 + $0xc] sm:$0xf]
    %v25 = vld [vmem:[%s1 + $0x10] sm:$0xf]
    %v26 = vld [vmem:[%s1 + $0x14] sm:$0xf]
    %v27 = vld [vmem:[%s1 + $0x18] sm:$0xf]
    %v28 = vld [vmem:[%s1 + $0x1c] sm:$0xf]
    %v29 = vld [vmem:[%s1 + $0x20] sm:$0xf]
    %v30 = vld [vmem:[%s1 + $0x24] sm:$0xf]
    %v31 = vld [vmem:[%s1 + $0x28] sm:$0xf]
    %v32 = vld [vmem:[%s1 + $0x2c] sm:$0xf]
    %v33 = vld [vmem:[%s1 + $0x30] sm:$0xf]
    %v34 = vld [vmem:[%s1 + $0x34] sm:$0xf]
    %v35 = vld [vmem:[%s1 + $0x38] sm:$0xf]
    %v36 = vld [vmem:[%s1 + $0x3c] sm:$0xf]
    %v37 = vld [vmem:[%s2] sm:$0x1]
    %v39 = vlaneseq
    %v40 = vshrl.u32 %v39, 7
    %v41 = vsub.s32 0, %v40
    %v42 = vrot.slane %v37, %v41
    %v46 = vunpack.c.l.b16 %v19
    %v47 = vunpack.c.l.b16 %v20
    %v48 = vpack.c.b16 %v47, %v46
    %v66 = vunpack.c.l.b16 %v21
    %v67 = vunpack.c.l.b16 %v22
    %v68 = vunpack.c.l.b16 %v23
    %v69 = vunpack.c.l.b16 %v24
    %v70 = vunpack.c.l.b16 %v25
    %v71 = vunpack.c.l.b16 %v26
    %v72 = vunpack.c.l.b16 %v27
    %v73 = vunpack.c.l.b16 %v28
    %v74 = vunpack.c.l.b16 %v29
    %v75 = vunpack.c.l.b16 %v30
    %v76 = vunpack.c.l.b16 %v31
    %v77 = vunpack.c.l.b16 %v32
    %v78 = vunpack.c.l.b16 %v33
    %v79 = vunpack.c.l.b16 %v34
    %v80 = vunpack.c.l.b16 %v35
    %v81 = vunpack.c.l.b16 %v36
    %v82 = vpack.c.b16 %v67, %v66
    %v83 = vpack.c.b16 %v69, %v68
    %v84 = vpack.c.b16 %v71, %v70
    %v85 = vpack.c.b16 %v73, %v72
    %v86 = vpack.c.b16 %v75, %v74
    %v87 = vpack.c.b16 %v77, %v76
    %v88 = vpack.c.b16 %v79, %v78
    %v89 = vpack.c.b16 %v81, %v80
    %98 = vmatprep.subr.bf16.mxu0 0
    %99 = vmatpush1.bf16.msra.mxu0 %v89
    %100 = vmatprep.subr.bf16.mxu0 0
    %101 = vmatpush1.bf16.msra.mxu0 %v88
    %102 = vmatprep.subr.bf16.mxu0 0
    %103 = vmatpush1.bf16.msra.mxu0 %v87
    %104 = vmatprep.subr.bf16.mxu0 0
    %105 = vmatpush1.bf16.msra.mxu0 %v86
    %106 = vmatprep.subr.bf16.mxu0 0
    %107 = vmatpush1.bf16.msra.mxu0 %v85
    %108 = vmatprep.subr.bf16.mxu0 0
    %109 = vmatpush1.bf16.msra.mxu0 %v84
    %110 = vmatprep.subr.bf16.mxu0 0
    %111 = vmatpush1.bf16.msra.mxu0 %v83
    %112 = vmatprep.subr.bf16.mxu0 0
    %113 = vmatpush1.bf16.msra.mxu0 %v82
    %114 = vmatprep.subr.bf16.mxu0 0
    %115 = vmatpush2.bf16.msra.mxu0 0
    %116 = vmatprep.subr.bf16.mxu0 0
    %117 = vmatpush2.bf16.msra.mxu0 0
    %118 = vmatprep.subr.bf16.mxu0 0
    %119 = vmatpush2.bf16.msra.mxu0 0
    %120 = vmatprep.subr.bf16.mxu0 0
    %121 = vmatpush2.bf16.msra.mxu0 0
    %122 = vmatprep.subr.bf16.mxu0 0
    %123 = vmatpush2.bf16.msra.mxu0 0
    %124 = vmatprep.subr.bf16.mxu0 0
    %125 = vmatpush2.bf16.msra.mxu0 0
    %126 = vmatprep.subr.bf16.mxu0 0
    %127 = vmatpush2.bf16.msra.mxu0 0
    %128 = vmatprep.subr.bf16.mxu0 0
    %129 = vmatpush2.bf16.msra.mxu0 0
    %130 = vmatprep.mubr.bf16.mxu0 0
    %131 = vmatmul.mubr.bf16.gmra.mxu0 %v48
    %v132 = vpop.f32.mrf.mxu0
    %v133 = vadd.f32 %v42, %v132
    %v134 = vpop.f32.mrf.mxu0
    %v135 = vpop.f32.mrf.mxu0
    %v136 = vadd.f32 %v42, %v135
    %v137 = vpop.f32.mrf.mxu0
    %138 = vdwg.mxu0
    %vm139 = vcmask 523264
    %v140 = vsel %vm139, %v133, -inf
    %141 = vmax.xlane.f32.xlu0 %v140
    %v142 = vpop.xlane.xlu0 %141
    %v143 = vsel %vm139, %v136, -inf
    %144 = vmax.xlane.f32.xlu0 %v143
    %v145 = vpop.xlane.xlu0 %144
    %v146 = vsub.f32 %v133, %v142
    %v147 = vsub.f32 %v136, %v145
    %v148 = vmul.f32 %v146, 1.442695
    %v149 = vpow.pop %v148
    %v150 = vmul.f32 %v147, 1.442695
    %v151 = vpow.pop %v150
    %v152 = vsel %vm139, %v149, 0.0
    %153 = vadd.xlane.f32.xlu0 %v152
    %v154 = vpop.xlane.xlu0 %153
    %v155 = vsel %vm139, %v151, 0.0
    %156 = vadd.xlane.f32.xlu0 %v155
    %v157 = vpop.xlane.xlu0 %156
    %v158 = vrcp.pop %v154
    %v159 = vrcp.pop %v157
    %v160 = vmul.f32 %v149, %v158
    %v161 = vmul.f32 %v151, %v159
    %v162 = vtanh.pop %v160
    %v163 = vtanh.pop %v161
    %v164 = vld [vmem:[%s3] sm:$0x1]
    %v166 = vlaneseq
    %v167 = vshrl.u32 %v166, 7
    %v168 = vsub.s32 0, %v167
    %v169 = vrot.slane %v164, %v168
    %v171 = vmul.f32 %v162, %v169
    %v172 = vmul.f32 %v163, %v169
    %v173 = vsel %vm139, %v171, 0.0
    %174 = vadd.xlane.f32.xlu0 %v173
    %v175 = vpop.xlane.xlu0 %174
    %v176 = vsel %vm139, %v172, 0.0
    %177 = vadd.xlane.f32.xlu0 %v176
    %v178 = vpop.xlane.xlu0 %177
    %v181 = vlaneseq
    %v182 = vand.u32 %v181, 127
    %v183 = vlaneseq
    %v184 = vshrl.u32 %v183, 7
    %v185 = vsub.s32 %v182, %v184
    %v186 = vrot.slane %v175, %v185
    %v187 = vlaneseq
    %v188 = vshrl.u32 %v187, 7
    %v189 = vsub.s32 %v182, %v188
    %v190 = vrot.slane %v178, %v189
    %vm191 = vcmask 1041409
    %v192 = vsel %vm191, %v190, %v186
    %vm194 = vcmask 58368
    %v195 = vsel %vm194, %v192, -inf
    %196 = vmax.xlane.f32.xlu0 %v195
    %v197 = vpop.xlane.xlu0 %196
    %v199 = vlaneseq
    %v200 = vshrl.u32 %v199, 7
    %v201 = vsub.s32 0, %v200
    %v202 = vrot.slane %v197, %v201
    %v203 = vlaneseq
    %v204 = vshrl.u32 %v203, 7
    %v205 = vsub.s32 1, %v204
    %v206 = vrot.slane %v197, %v205
    %v209 = vsub.f32 %v175, %v202
    %v210 = vsub.f32 %v178, %v206
    %v211 = vmul.f32 %v209, 1.442695
    %v212 = vpow.pop %v211
    %v213 = vmul.f32 %v210, 1.442695
    %v214 = vpow.pop %v213
    %217 = vset.pattern.permute.xlu0 0
    %218 = vperm.xlu0 %217, %v212
    %v219 = vpop.permute.xlu0 %218
    %220 = vset.pattern.permute.xlu0 0
    %221 = vperm.xlu0 %220, %v214
    %v222 = vpop.permute.xlu0 %221
    %v223 = vlaneseq
    %v224 = vshrl.u32 %v223, 7
    %v225 = vsub.s32 %v182, %v224
    %v226 = vrot.slane %v219, %v225
    %v227 = vlaneseq
    %v228 = vshrl.u32 %v227, 7
    %v229 = vsub.s32 %v182, %v228
    %v230 = vrot.slane %v222, %v229
    %v231 = vsel %vm191, %v230, %v226
    %v233 = vsel %vm194, %v231, 0.0
    %234 = vadd.xlane.f32.xlu0 %v233
    %v235 = vpop.xlane.xlu0 %234
    %v236 = vrcp.pop %v235
    %v238 = vlaneseq
    %v239 = vshrl.u32 %v238, 7
    %v240 = vsub.s32 0, %v239
    %v241 = vrot.slane %v236, %v240
    %v242 = vlaneseq
    %v243 = vshrl.u32 %v242, 7
    %v244 = vsub.s32 1, %v243
    %v245 = vrot.slane %v236, %v244
    %v248 = vmul.f32 %v212, %v241
    %v249 = vmul.f32 %v214, %v245
    %252 = vset.pattern.permute.xlu0 0
    %253 = vperm.xlu0 %252, %v248
    %v254 = vpop.permute.xlu0 %253
    %255 = vset.pattern.permute.xlu0 0
    %256 = vperm.xlu0 %255, %v249
    %v257 = vpop.permute.xlu0 %256
    %v258 = vlaneseq
    %v259 = vshrl.u32 %v258, 7
    %v260 = vsub.s32 %v182, %v259
    %v261 = vrot.slane %v254, %v260
    %v262 = vlaneseq
    %v263 = vshrl.u32 %v262, 7
    %v264 = vsub.s32 %v182, %v263
    %v265 = vrot.slane %v257, %v264
    %v266 = vsel %vm191, %v265, %v261
    %268 = vst.msk [vmem:[#allocation2] sm:$0x3] %vm194, %v266
    // Predicated region
    $region18: #{tpu_custom_call.1} parent=1 // pred_check
      _
    $region19: #{tpu_custom_call.1} parent=1 // pred_check_branch
      %270 = sbr.rel (0) target = $region21
    $region20: #{tpu_custom_call.1} parent=1 // pred_region
      %s272 = ssub.s32 32, 32
      %273 = vsyncadd [#allocation3], %s272
      %s275 = sshll.u32 [#allocation2], 4
      %s276 = int_to_ptr.vmem [resolvable:$true] %s275
      %278 = dma.vmem_to_hbm [thread:$0]  %s276, 32, %s4, [#allocation3]
    $region21: #{tpu_custom_call.1} parent=1 // pred_fallthru
      _
    // Predicated region
    $region22: #{tpu_custom_call.1} parent=1 // pred_check
      _
    $region23: #{tpu_custom_call.1} parent=1 // pred_check_branch
      %280 = sbr.rel (0) target = $region25
    $region24: #{tpu_custom_call.1} parent=1 // pred_region
      %281 = dma.done [#allocation3], 32
    $region25: #{tpu_custom_call.1} parent=1 // pred_fallthru
      _
    %282 = vsyncpa [#allocation3], 1

</llo_original>
